<compile_context>
chip_gen: v7x
topology: tpu7x:2x2x1
jax: 0.10.0
libtpu: 0.0.40
codegen_flags: <defaults>
</compile_context>

<pallas_src>
import math
from functools import partial

import jax
import jax.numpy as jnp
from jax.experimental import pallas as pl
from jax.experimental.pallas import tpu as pltpu


# ----------------------------------------------------------------------------
# Pallas kernel: tiled matmul + bias + activation (the whole ConvTranspose)
# ----------------------------------------------------------------------------
def _matmul_bias_act_kernel(x_ref, w_ref, b_ref, o_ref, *, act, neg_slope):
    # x: (TM, K) bf16 ; w: (K, N) bf16 ; b: (1, N) f32 ; o: (TM, N) bf16
    # f32 accumulate on the MXU; keep the epilogue in f32 (v5e has no bf16
    # VPU/EUP path); cast to bf16 only at the store.
    y = jnp.dot(x_ref[...], w_ref[...], preferred_element_type=jnp.float32)
    y = y + b_ref[...]
    if act == "relu":
        y = jnp.maximum(y, 0.0)
    elif act == "leaky_relu":
        y = jnp.where(y >= 0.0, y, y * neg_slope)
    elif act == "sigmoid":
        y = jax.nn.sigmoid(y)
    # act is None -> identity
    o_ref[...] = y.astype(o_ref.dtype)


def _pad128(n):
    return -(-n // 128) * 128


def _tile_vmem_bytes(tm, k, n):
    """Conservative per-call VMEM footprint: every pipelined input/output gets
    two buffers by default (weight/bias included, even with a constant block
    index), and lane dims are padded to 128."""
    kp, np_ = _pad128(k), _pad128(n)
    return 2 * (tm * kp * 2 + tm * np_ * 2 + kp * np_ * 2 + 8 * np_ * 4)


def _pick_tile_m(m, k, n):
    if m <= 256:
        return m                      # single full-extent block
    tm = 2048                         # big tiles for v5e/v6e (fewer step overheads)
    # keep >= 8 grid steps when possible so v7x's two TensorCores each see
    # >= 4 pipelined steps and the DMA head/tail stays hidden.
    while tm > 256 and m // tm < 8:
        tm //= 2
    while tm > 256 and _tile_vmem_bytes(tm, k, n) > (40 << 20):
        tm //= 2
    return min(tm, m)


def matmul_bias_act(x_bf16, w_bf16, b_f32, act=None, neg_slope=0.01):
    """y = act(x @ w + b); x:(M,K) bf16, w:(K,N) bf16, b:(N,) f32 -> (M,N) bf16."""
    M, K = x_bf16.shape
    N = w_bf16.shape[1]
    b2 = b_f32.reshape(1, N).astype(jnp.float32)

    tm = _pick_tile_m(M, K, N)
    grid = (pl.cdiv(M, tm),)

    needed = _tile_vmem_bytes(tm, K, N)
    vmem_limit = int(min(max(needed + (4 << 20), 16 << 20), 48 << 20))

    cost = pl.CostEstimate(
        flops=2 * M * K * N,
        transcendentals=(M * N if act == "sigmoid" else 0),
        bytes_accessed=M * K * 2 + K * N * 2 + N * 4 + M * N * 2,   # bf16 out
    )

    return pl.pallas_call(
        partial(_matmul_bias_act_kernel, act=act, neg_slope=neg_slope),
        out_shape=jax.ShapeDtypeStruct((M, N), jnp.bfloat16),
        grid=grid,
        in_specs=[
            pl.BlockSpec((tm, K), lambda i: (i, 0)),     # activation tile
            pl.BlockSpec((K, N), lambda i: (0, 0)),      # full weight (tiny)
            pl.BlockSpec((1, N), lambda i: (0, 0)),      # bias row
        ],
        out_specs=pl.BlockSpec((tm, N), lambda i: (i, 0)),
        compiler_params=pltpu.CompilerParams(
            dimension_semantics=("parallel",),
            vmem_limit_bytes=vmem_limit,
        ),
        cost_estimate=cost,
    )(x_bf16, w_bf16, b2)


# ----------------------------------------------------------------------------
# ConvTrans2dBlock (ConvTranspose2d + optional BN + activation)
# ----------------------------------------------------------------------------
def _pair(v):
    return (v, v) if isinstance(v, int) else tuple(v)


def _parse_act(act):
    if act is None or act == "None":
        return None, 0.0
    if act == "relu":
        return "relu", 0.0
    if isinstance(act, str) and act.startswith("leaky_relu"):
        ns = float(act.split("(", 1)[1].split(")", 1)[0])
        return "leaky_relu", ns
    if act == "sigmoid":
        return "sigmoid", 0.0
    # TODO(synk): 'prelu' carries a learned slope parameter; not mapped here.
    raise NotImplementedError(act)


class ConvTrans2dBlock:
    """Pallas port of the PyTorch ConvTrans2dBlock.

    Supports the configuration the baseline model uses: stride == kernel_size
    (non-overlapping sub-pixel deconv), padding=0, output_padding=0,
    dilation=1, groups=1.  BatchNorm is supported in eval mode (running stats
    folded into the matmul weights/bias).
    """

    def __init__(self, in_channels, out_channels, kernel_size, stride,
                 padding, output_padding, dilation=1, groups=1,
                 bn=False, act="relu", *, key):
        kh, kw = _pair(kernel_size)
        sh, sw = _pair(stride)
        ph, pw = _pair(padding)
        oph, opw = _pair(output_padding)
        if ((kh, kw) != (sh, sw) or (ph, pw) != (0, 0) or (oph, opw) != (0, 0)
                or dilation != 1 or groups != 1):
            # TODO(synk): general overlapping ConvTranspose2d (stride!=kernel,
            # padding/output_padding/dilation/groups) is not lowered to Pallas.
            raise NotImplementedError(
                "only stride==kernel_size, padding=0, output_padding=0, "
                "dilation=1, groups=1 is implemented")
        self.in_channels = in_channels
        self.out_channels = out_channels
        self.kh, self.kw = kh, kw
        self.bn = bool(bn)
        self.eps = 1e-5
        self.act_name, self.neg_slope = _parse_act(act)

        k_w, k_b, k_g, k_be, k_m, k_v = jax.random.split(key, 6)
        bound = 1.0 / math.sqrt(in_channels * kh * kw)
        # PyTorch ConvTranspose2d weight layout: (Cin, Cout, kh, kw)
        self.weight = jax.random.uniform(
            k_w, (in_channels, out_channels, kh, kw), jnp.float32, -bound, bound)
        self.bias = (None if self.bn else
                     jax.random.uniform(k_b, (out_channels,), jnp.float32,
                                        -bound, bound))
        if self.bn:
            # eval-mode BatchNorm parameters / running stats.
            # TODO(synk): training-mode BN (batch statistics + running-stat
            # updates) is not implemented; eval-mode fold only.
            self.gamma = jax.random.uniform(k_g, (out_channels,), jnp.float32, 0.5, 1.5)
            self.beta = 0.1 * jax.random.normal(k_be, (out_channels,), jnp.float32)
            self.running_mean = 0.1 * jax.random.normal(k_m, (out_channels,), jnp.float32)
            self.running_var = jax.random.uniform(k_v, (out_channels,), jnp.float32, 0.5, 1.5)

    def _folded_weight_bias(self):
        """Fold (eval-mode) BatchNorm into the conv weight/bias."""
        w = self.weight
        if self.bn:
            scale = self.gamma / jnp.sqrt(self.running_var + self.eps)
            w = w * scale[None, :, None, None]
            b = self.beta - self.running_mean * scale
        else:
            b = self.bias
        return w, b

    def __call__(self, x_nchw):
        N, Cin, H, W = x_nchw.shape
        kh, kw, Cout = self.kh, self.kw, self.out_channels
        Nout = kh * kw * Cout
        M = N * H * W

        w, b = self._folded_weight_bias()
        # (Cin, Cout, kh, kw) -> (Cin, kh*kw*Cout) with lane order (a, b, co)
        w2 = jnp.transpose(w, (0, 2, 3, 1)).reshape(Cin, Nout)
        b2 = jnp.tile(b, kh * kw)

        # NCHW -> NHWC fused with the bf16 downcast: a single HBM pass that
        # writes bf16 (no intermediate f32 NHWC copy).
        x_flat = jnp.transpose(x_nchw, (0, 2, 3, 1)).astype(jnp.bfloat16)
        x_flat = x_flat.reshape(M, Cin)

        # Lane-dense output: if kh*kw*Cout is not a multiple of 128, pack `p`
        # consecutive pixels into one matmul row with a block-diagonal weight.
        # Row-major, the (M/p, p*Nout) result is bit-identical to (M, Nout),
        # so this only changes the kernel's store width (full 128-lane vst).
        p = 128 // math.gcd(Nout, 128)
        if p > 1 and p <= 8 and M % p == 0:
            xk = x_flat.reshape(M // p, p * Cin)
            wk = jnp.kron(jnp.eye(p, dtype=jnp.float32), w2).astype(jnp.bfloat16)
            bk = jnp.tile(b2, p)
        else:
            # TODO(synk): Nout stays < 128 lanes here -> masked partial stores.
            p = 1
            xk, wk, bk = x_flat, w2.astype(jnp.bfloat16), b2

        y = matmul_bias_act(xk, wk, bk, act=self.act_name,
                            neg_slope=self.neg_slope)          # bf16

        # Pixel-shuffle + NHWC->NCHW + f32 upcast expressed as ONE 6-D
        # transpose so XLA emits a single layout pass reading bf16.
        # TODO(synk): emitting NCHW directly from the kernel would need a
        # block-diagonal-over-W weight (W x more MXU work); not lowered here.
        y = y.reshape(N, H, W, kh, kw, Cout)
        y = jnp.transpose(y, (0, 5, 1, 3, 2, 4))               # (N,Cout,H,kh,W,kw)
        return y.reshape(N, Cout, kh * H, kw * W).astype(jnp.float32)


# ----------------------------------------------------------------------------
# Pure-JAX reference (same bf16 operand/output rounding) for self-validation
# ----------------------------------------------------------------------------
def reference_forward(block, x_nchw):
    w, b = block._folded_weight_bias()
    xb = x_nchw.astype(jnp.bfloat16).astype(jnp.float32)
    wb = w.astype(jnp.bfloat16).astype(jnp.float32)
    N, Cin, H, W = x_nchw.shape
    kh, kw, Cout = block.kh, block.kw, block.out_channels
    y = jnp.einsum("nihw,ioab->nohawb", xb, wb)
    y = y.reshape(N, Cout, kh * H, kw * W) + b[None, :, None, None]
    if block.act_name == "relu":
        y = jnp.maximum(y, 0.0)
    elif block.act_name == "leaky_relu":
        y = jnp.where(y >= 0.0, y, y * block.neg_slope)
    elif block.act_name == "sigmoid":
        y = jax.nn.sigmoid(y)
    return y.astype(jnp.bfloat16).astype(jnp.float32)


if __name__ == "__main__":
    key = jax.random.PRNGKey(0)
    k_blk1, k_blk2, k_data = jax.random.split(key, 3)

    # Cout=32, k=2 -> kernel output lane width 4*32 = 128 (fully lane-dense).
    N, Cin, H, W = 2, 32, 16, 16
    Cout, ksize, stride = 32, 2, 2

    block = ConvTrans2dBlock(Cin, Cout, ksize, stride, 0, 0,
                             bn=False, act="relu", key=k_blk1)
    x = jax.random.normal(k_data, (N, Cin, H, W), jnp.float32)

    y = jax.jit(block.__call__)(x)
    jax.block_until_ready(y)
    assert y.shape == (N, Cout, ksize * H, stride * W)
    assert bool(jnp.all(jnp.isfinite(y)))
    err = float(jnp.max(jnp.abs(y - reference_forward(block, x))))
    assert err < 2e-2, f"mismatch vs reference: {err}"

    # Second config: eval-mode BN fold + leaky_relu, Cout=16 -> Nout=64 is
    # made lane-dense via the p=2 pixel-packing path.
    block2 = ConvTrans2dBlock(Cin, 16, 2, 2, 0, 0,
                              bn=True, act="leaky_relu(0.2)", key=k_blk2)
    y2 = jax.jit(block2.__call__)(x)
    jax.block_until_ready(y2)
    assert y2.shape == (N, 16, 2 * H, 2 * W)
    assert bool(jnp.all(jnp.isfinite(y2)))
    err2 = float(jnp.max(jnp.abs(y2 - reference_forward(block2, x))))
    assert err2 < 2e-2, f"mismatch vs reference (bn): {err2}"

    print("KERNEL_OK")
</pallas_src>

<mosaic_0001>
module attributes {stable_mosaic.version = 11 : i64} {
  func.func @_matmul_bias_act_kernel(%arg0: i32, %arg1: memref<256x32xbf16, #tpu.memory_space<vmem>>, %arg2: memref<32x128xbf16, #tpu.memory_space<vmem>>, %arg3: memref<1x128xf32, #tpu.memory_space<vmem>>, %arg4: memref<256x128xbf16, #tpu.memory_space<vmem>>) attributes {dimension_semantics = [#tpu.dimension_semantics<parallel>], iteration_bounds = array<i64: 2>, scalar_prefetch = 0 : i64, scratch_operands = 0 : i64, tpu.core_type = #tpu.core_type<tc>, window_params = [{transform_indices = @transform_0, window_bounds = array<i64: 256, 32>}, {pipeline_mode = #tpu.pipeline_mode<synchronous>, transform_indices = @transform_1, window_bounds = array<i64: 32, 128>}, {pipeline_mode = #tpu.pipeline_mode<synchronous>, transform_indices = @transform_2, window_bounds = array<i64: 1, 128>}, {transform_indices = @transform_3, window_bounds = array<i64: 256, 128>}]} {
    %c0 = arith.constant 0 : index
    %c0_0 = arith.constant 0 : index
    %0 = vector.load %arg1[%c0, %c0_0] : memref<256x32xbf16, #tpu.memory_space<vmem>>, vector<256x32xbf16>
    %c0_1 = arith.constant 0 : index
    %c0_2 = arith.constant 0 : index
    %1 = vector.load %arg2[%c0_1, %c0_2] : memref<32x128xbf16, #tpu.memory_space<vmem>>, vector<32x128xbf16>
    %cst = arith.constant dense<0.000000e+00> : vector<256x128xf32>
    %2 = tpu.matmul %0, %1, %cst {dimension_numbers = #tpu.dot_dimension_numbers<[1], [0], [0], [1], [0, 0, 1, 1], [], []>} : vector<256x32xbf16>, vector<32x128xbf16>, vector<256x128xf32> -> vector<256x128xf32>
    %c0_3 = arith.constant 0 : index
    %c0_4 = arith.constant 0 : index
    %3 = vector.load %arg3[%c0_3, %c0_4] : memref<1x128xf32, #tpu.memory_space<vmem>>, vector<1x128xf32>
    %4 = vector.broadcast %3 : vector<1x128xf32> to vector<256x128xf32>
    %5 = arith.addf %2, %4 : vector<256x128xf32>
    %cst_5 = arith.constant 0.000000e+00 : f32
    %6 = vector.broadcast %cst_5 : f32 to vector<256x128xf32>
    %7 = arith.maximumf %5, %6 : vector<256x128xf32>
    %8 = arith.truncf %7 : vector<256x128xf32> to vector<256x128xbf16>
    %c0_6 = arith.constant 0 : index
    %c0_7 = arith.constant 0 : index
    %9 = vector.load %arg4[%c0_6, %c0_7] : memref<256x128xbf16, #tpu.memory_space<vmem>>, vector<256x128xbf16>
    tpu.vector_store %arg4[%c0_6, %c0_7], %8 {strides = array<i32>} : memref<256x128xbf16, #tpu.memory_space<vmem>>, vector<256x128xbf16>,
    return
  }
  func.func @transform_0(%arg0: i32) -> (i32, i32) {
    %c0_i32 = arith.constant 0 : i32
    %c0_i32_0 = arith.constant 0 : i32
    return %arg0, %c0_i32 : i32, i32
  }
  func.func @transform_1(%arg0: i32) -> (i32, i32) {
    %c0_i32 = arith.constant 0 : i32
    %c0_i32_0 = arith.constant 0 : i32
    %c0_i32_1 = arith.constant 0 : i32
    return %c0_i32, %c0_i32_0 : i32, i32
  }
  func.func @transform_2(%arg0: i32) -> (i32, i32) {
    %c0_i32 = arith.constant 0 : i32
    %c0_i32_0 = arith.constant 0 : i32
    %c0_i32_1 = arith.constant 0 : i32
    return %c0_i32, %c0_i32_0 : i32, i32
  }
  func.func @transform_3(%arg0: i32) -> (i32, i32) {
    %c0_i32 = arith.constant 0 : i32
    %c0_i32_0 = arith.constant 0 : i32
    return %arg0, %c0_i32 : i32, i32
  }
}

</mosaic_0001>

<llo_original>
// kernel: tile.6
$region0: #{tile.6}
  #allocation0 [shape = 's32[1]{0}', space=sflag, size = 0x4, scoped, tag = 'scoped memory for tile.6']
  %s0 = inlined_call_operand.vmem [shape: f32[32], index: 0, kind: input, shape index: {}]
  %s1 = inlined_call_operand.vmem [shape: f32[4,32], index: 1, kind: output, shape index: {}]
  // Predicated region
  $region2: #{tile.6} parent=0 // pred_check
    _
  $region3: #{tile.6} parent=0 // pred_check_branch
    %3 = sbr.rel (0) target = $region5
  $region4: #{tile.6} parent=0 // pred_region
    _
  $region5: #{tile.6} parent=0 // pred_fallthru
    _
  %v4 = vld [vmem:[%s0] ss:$0 sm:$0xff]
  %5 = vst [vmem:[%s1] sm:$0xf] %v4

// kernel: tile.7
$region0: #{tile.7}
  %s0 = inlined_call_operand.vmem [shape: f32[4,32], index: 0, kind: input, shape index: {}]
  %s1 = inlined_call_operand.vmem [shape: f32[1,128], index: 1, kind: output, shape index: {}]
  $region1: #{tile.7} parent=0
    #allocation0 [shape = 'u8[4096]{0}', space=vmem, size = 0x1000, scoped, tag = 'scoped mem for output reshape']
    #allocation1 [shape = 'u8[4096]{0}', space=vmem, size = 0x1000, scoped, tag = 'scoped mem for input reshape']
    %s3 = sshllo.u32 0, 4
    %v4 = vld [vmem:[%s0] sm:%s3]
    %5 = vst [vmem:[#allocation1] sm:%s3] %v4
    %v6 = vld [vmem:[#allocation1] sm:$0x1]
    %vm7 = vcmask 261120
    %8 = vst.msk [vmem:[#allocation0] sm:$0x1] %vm7, %v6
    %s9 = scalar_lea.vmem [#allocation1], 3
    %v10 = vld [vmem:[%s9] sm:$0x1]
    %11 = vrot.lane.b32.xlu0 %v10, 96
    %v12 = vpop.permute.xlu0 %11
    %vm13 = vcmask 1048320
    %14 = vst.msk [vmem:[#allocation0] sm:$0x1] %vm13, %v12
    %s15 = scalar_lea.vmem [#allocation1], 2
    %v16 = vld [vmem:[%s15] sm:$0x1]
    %17 = vrot.lane.b32.xlu0 %v16, 64
    %v18 = vpop.permute.xlu0 %17
    %vm19 = vcmask 785920
    %20 = vst.msk [vmem:[#allocation0] sm:$0x1] %vm19, %v18
    %s21 = scalar_lea.vmem [#allocation1], 1
    %v22 = vld [vmem:[%s21] sm:$0x1]
    %23 = vrot.lane.b32.xlu0 %v22, 32
    %v24 = vpop.permute.xlu0 %23
    %vm25 = vcmask 523520
    %26 = vst.msk [vmem:[#allocation0] sm:$0x1] %vm25, %v24
    %s28 = sshllo.u32 0, 1
    %v30 = vld [vmem:[#allocation0] sm:%s28]
    %s31 = sshllo.u32 0, 1
    %32 = vst [vmem:[%s1] sm:%s31] %v30

// kernel: a_call__.1
$region0: #{a_call__.1}
  #allocation0 [shape = 'u32[]', space=smem, size = 0x4, offset = 0x4, fixed_abs, tag = 'smem constant byte address 0x4 - core index']
  #allocation1 [shape = 'u32[144,128]{1,0:T(1,128)}', space=vmem, size = 0x12000, scoped, tag = 'internal scratch']
  %s0 = inlined_call_operand.vmem [shape: bf16[512,32], index: 0, kind: input, shape index: {}]
  %s1 = inlined_call_operand.vmem [shape: bf16[32,128], index: 1, kind: input, shape index: {}]
  %s2 = inlined_call_operand.vmem [shape: f32[1,128], index: 2, kind: input, shape index: {}]
  %s3 = inlined_call_operand.vmem [shape: bf16[512,128], index: 3, kind: output, shape index: {}]
  %s4 = sld [smem:[#allocation0]]
  $region45: #{a_call__.1} parent=0
    _
  %s6 = ssub.s32 1, %s4
  %s7 = scalar_select 0, %s6, %s4
  loop: start=0, step=1, limit=4
  $region2: #{a_call__.1} parent=0 // loop_pre_header
    _
  $region3: #{a_call__.1} parent=0 // loop_header
    %s9 = sphi 0, %s13
    %p10 = scmp.ge.s32.totalorder %s9, 4
    %s19 = sphi 0, %s21
    %s22 = sphi 0, %s19
    %s23 = sphi 0, %s22
    %s39 = sphi 0, %s23
    %s43 = sphi 0, %s43
    %s45 = sphi 0, %s43
    %s46 = sphi 0, %s45
    %s60 = sphi 0, %s46
    %s64 = sphi 0, %s64
    %s66 = sphi 0, %s64
    %s67 = sphi 0, %s66
    %s81 = sphi 0, %s67
    %s87 = sphi 0, %s89
    %s90 = sphi 0, %s87
    %s91 = sphi 0, %s90
    %s107 = sphi 0, %s91
  $region4: #{a_call__.1} parent=0 // loop_header_branch
    %12 = sbr.rel (%p10) target = $region8
  $region5: #{a_call__.1} parent=0 // loop_body
    %s14 = ssub.s32 %s9, 1
    %s15 = ssub.s32 %s9, 2
    %s16 = sadd.s32 %s9, 1
    %s17 = ssub.s32 %s9, %s16
    %p18 = scmp.eq.s32.totalorder %s17, 0
    %s20 = sadd.s32 %s19, 1
    %s21 = scalar_select %p18, %s19, %s20
    %p24 = pneg %p18
    %p25 = scmp.eq.s32.totalorder %s9, 1
    %p26 = por %p24, %p25
    %p27 = scmp.ne.s32.totalorder %s19, %s22
    %p28 = scmp.eq.s32.totalorder %s9, 0
    %p29 = por %p27, %p28
    %p30 = scmp.ne.s32.totalorder %s19, %s22
    %p31 = scmp.eq.s32.totalorder %s14, 1
    %p32 = por %p30, %p31
    %p33 = scmp.ne.s32.totalorder %s22, %s23
    %p34 = scmp.eq.s32.totalorder %s14, 0
    %p35 = por %p33, %p34
    %p36 = scmp.ne.s32.totalorder %s22, %s23
    %p37 = scmp.eq.s32.totalorder %s15, 1
    %p38 = por %p36, %p37
    %p40 = scmp.ne.s32.totalorder %s23, %s39
    %p41 = scmp.eq.s32.totalorder %s15, 0
    %p42 = por %p40, %p41
    %s44 = sadd.s32 %s43, 1
    %p47 = scmp.eq.s32.totalorder %s9, 1
    %p48 = scmp.ne.s32.totalorder %s43, %s45
    %p49 = scmp.eq.s32.totalorder %s9, 0
    %p50 = por %p48, %p49
    %p51 = scmp.ne.s32.totalorder %s43, %s45
    %p52 = scmp.eq.s32.totalorder %s14, 1
    %p53 = por %p51, %p52
    %p54 = scmp.ne.s32.totalorder %s45, %s46
    %p55 = scmp.eq.s32.totalorder %s14, 0
    %p56 = por %p54, %p55
    %p57 = scmp.ne.s32.totalorder %s45, %s46
    %p58 = scmp.eq.s32.totalorder %s15, 1
    %p59 = por %p57, %p58
    %p61 = scmp.ne.s32.totalorder %s46, %s60
    %p62 = scmp.eq.s32.totalorder %s15, 0
    %p63 = por %p61, %p62
    %s65 = sadd.s32 %s64, 1
    %p68 = scmp.eq.s32.totalorder %s9, 1
    %p69 = scmp.ne.s32.totalorder %s64, %s66
    %p70 = scmp.eq.s32.totalorder %s9, 0
    %p71 = por %p69, %p70
    %p72 = scmp.ne.s32.totalorder %s64, %s66
    %p73 = scmp.eq.s32.totalorder %s14, 1
    %p74 = por %p72, %p73
    %p75 = scmp.ne.s32.totalorder %s66, %s67
    %p76 = scmp.eq.s32.totalorder %s14, 0
    %p77 = por %p75, %p76
    %p78 = scmp.ne.s32.totalorder %s66, %s67
    %p79 = scmp.eq.s32.totalorder %s15, 1
    %p80 = por %p78, %p79
    %p82 = scmp.ne.s32.totalorder %s67, %s81
    %p83 = scmp.eq.s32.totalorder %s15, 0
    %p84 = por %p82, %p83
    %s85 = ssub.s32 %s9, %s16
    %p86 = scmp.eq.s32.totalorder %s85, 0
    %s88 = sadd.s32 %s87, 1
    %s89 = scalar_select %p86, %s87, %s88
    %p92 = pneg %p86
    %p93 = scmp.eq.s32.totalorder %s9, 1
    %p94 = por %p92, %p93
    %p95 = scmp.ne.s32.totalorder %s87, %s90
    %p96 = scmp.eq.s32.totalorder %s9, 0
    %p97 = por %p95, %p96
    %p98 = scmp.ne.s32.totalorder %s87, %s90
    %p99 = scmp.eq.s32.totalorder %s14, 1
    %p100 = por %p98, %p99
    %p101 = scmp.ne.s32.totalorder %s90, %s91
    %p102 = scmp.eq.s32.totalorder %s14, 0
    %p103 = por %p101, %p102
    %p104 = scmp.ne.s32.totalorder %s90, %s91
    %p105 = scmp.eq.s32.totalorder %s15, 1
    %p106 = por %p104, %p105
    %p108 = scmp.ne.s32.totalorder %s91, %s107
    %p109 = scmp.eq.s32.totalorder %s15, 0
    %p110 = por %p108, %p109
    %p111 = scmp.le.s32.totalorder 1, %s9
    %p112 = scmp.lt.s32.totalorder %s9, 3
    %p113 = pnand %p111, %p112
    %p114 = pneg %p113
    // Predicated region
    $region9: #{a_call__.1} parent=5 // pred_check
      _
    $region10: #{a_call__.1} parent=5 // pred_check_branch
      %116 = sbr.rel (%p113) target = $region12
    $region11: #{a_call__.1} parent=5 // pred_region
      %s117 = ssub.s32 %s9, 1
      // Predicated region
      $region13: #{a_call__.1} parent=11 // pred_check
        %p118 = pneg %p56
      $region14: #{a_call__.1} parent=11 // pred_check_branch
        %120 = sbr.rel (%p118) target = $region16
      $region15: #{a_call__.1} parent=11 // pred_region
        _
      $region16: #{a_call__.1} parent=11 // pred_fallthru
        _
      // Predicated region
      $region17: #{a_call__.1} parent=11 // pred_check
        %p121 = pneg %p77
      $region18: #{a_call__.1} parent=11 // pred_check_branch
        %123 = sbr.rel (%p121) target = $region20
      $region19: #{a_call__.1} parent=11 // pred_region
        _
      $region20: #{a_call__.1} parent=11 // pred_fallthru
        _
    $region12: #{a_call__.1} parent=5 // pred_fallthru
      _
    %p124 = scmp.lt.s32.totalorder %s9, 2
    // Predicated region
    $region21: #{a_call__.1} parent=5 // pred_check
      %p125 = pneg %p124
    $region22: #{a_call__.1} parent=5 // pred_check_branch
      %127 = sbr.rel (%p125) target = $region24
    $region23: #{a_call__.1} parent=5 // pred_region
      // Predicated region
      $region25: #{a_call__.1} parent=23 // pred_check
        %p128 = pneg %p29
      $region26: #{a_call__.1} parent=23 // pred_check_branch
        %130 = sbr.rel (%p128) target = $region28
      $region27: #{a_call__.1} parent=23 // pred_region
        %s131 = smul.u32 32, %s9
        %p132 = scmp.lt.s32.totalorder %s131, 63
        %s133 = scalar_select %p132, %s131, 63
        %s134 = smul.addr %s133, 4
        %s135 = scalar_lea.vmem %s0, %s134
        %s136 = smul.u32 32, %s9
      $region28: #{a_call__.1} parent=23 // pred_fallthru
        _
    $region24: #{a_call__.1} parent=5 // pred_fallthru
      _
    %p137 = scmp.le.s32.totalorder 1, %s9
    %p138 = scmp.lt.s32.totalorder %s9, 3
    %p139 = pnand %p137, %p138
    %p140 = pneg %p139
    // Predicated region
    $region29: #{a_call__.1} parent=5 // pred_check
      _
    $region30: #{a_call__.1} parent=5 // pred_check_branch
      %142 = sbr.rel (%p139) target = $region32
    $region31: #{a_call__.1} parent=5 // pred_region
      %s143 = ssub.s32 %s9, 1
      %s144 = smul.u32 32, %s14
      %p145 = scmp.lt.s32.totalorder %s144, 63
      %s146 = scalar_select %p145, %s144, 63
      %s147 = smul.addr %s146, 4
      %s148 = scalar_lea.vmem %s0, %s147
      %p149 = pneg %p35
      %p150 = pneg %p32
      %p151 = pneg %p56
      %p152 = pneg %p53
      %p153 = pneg %p77
      %p154 = pneg %p74
      %p155 = pneg %p103
      %p156 = pneg %p100
      %s157 = smul.u32 32, %s14
      %p158 = scmp.lt.s32.totalorder %s157, 63
      %s159 = scalar_select %p158, %s157, 63
      %s160 = smul.addr %s159, 4
      %s161 = scalar_lea.vmem %s3, %s160
      %s162 = smul.u32 32, %s14
      %p163 = scmp.lt.s32.totalorder %s162, 63
      %s164 = scalar_select %p163, %s162, 63
      %s165 = smul.addr %s164, 4
      %s166 = scalar_lea.vmem %s0, %s165
      %s167 = smul.u32 32, %s14
      %s168 = smul.u32 32, %s14
      %p169 = scmp.lt.s32.totalorder %s168, 63
      %s170 = scalar_select %p169, %s168, 63
      %s171 = smul.addr %s170, 4
      %s172 = scalar_lea.vmem %s3, %s171
      %s173 = smul.u32 32, %s14
      %v175 = vld [vmem:[%s166] sm:$0xf]
      %v176 = vld [vmem:[%s166 + $0x4] sm:$0xf]
      %v177 = vld [vmem:[%s166 + $0x8] sm:$0xf]
      %v178 = vld [vmem:[%s166 + $0xc] sm:$0xf]
      %v179 = vld [vmem:[%s166 + $0x10] sm:$0xf]
      %v180 = vld [vmem:[%s166 + $0x14] sm:$0xf]
      %v181 = vld [vmem:[%s166 + $0x18] sm:$0xf]
      %v182 = vld [vmem:[%s166 + $0x1c] sm:$0xf]
      %v183 = vld [vmem:[%s166 + $0x20] sm:$0xf]
      %v184 = vld [vmem:[%s166 + $0x24] sm:$0xf]
      %v185 = vld [vmem:[%s166 + $0x28] sm:$0xf]
      %v186 = vld [vmem:[%s166 + $0x2c] sm:$0xf]
      %v187 = vld [vmem:[%s166 + $0x30] sm:$0xf]
      %v188 = vld [vmem:[%s166 + $0x34] sm:$0xf]
      %v189 = vld [vmem:[%s166 + $0x38] sm:$0xf]
      %v190 = vld [vmem:[%s166 + $0x3c] sm:$0xf]
      %v191 = vld [vmem:[%s166 + $0x40] sm:$0xf]
      %v192 = vld [vmem:[%s166 + $0x44] sm:$0xf]
      %v193 = vld [vmem:[%s166 + $0x48] sm:$0xf]
      %v194 = vld [vmem:[%s166 + $0x4c] sm:$0xf]
      %v195 = vld [vmem:[%s166 + $0x50] sm:$0xf]
      %v196 = vld [vmem:[%s166 + $0x54] sm:$0xf]
      %v197 = vld [vmem:[%s166 + $0x58] sm:$0xf]
      %v198 = vld [vmem:[%s166 + $0x5c] sm:$0xf]
      %v199 = vld [vmem:[%s166 + $0x60] sm:$0xf]
      %v200 = vld [vmem:[%s166 + $0x64] sm:$0xf]
      %v201 = vld [vmem:[%s166 + $0x68] sm:$0xf]
      %v202 = vld [vmem:[%s166 + $0x6c] sm:$0xf]
      %v203 = vld [vmem:[%s166 + $0x70] sm:$0xf]
      %v204 = vld [vmem:[%s166 + $0x74] sm:$0xf]
      %v205 = vld [vmem:[%s166 + $0x78] sm:$0xf]
      %v206 = vld [vmem:[%s166 + $0x7c] sm:$0xf]
      %v207 = vld [vmem:[%s1] sm:$0xf]
      %v208 = vld [vmem:[%s1 + $0x4] sm:$0xf]
      %v209 = vld [vmem:[%s1 + $0x8] sm:$0xf]
      %v210 = vld [vmem:[%s1 + $0xc] sm:$0xf]
      %v211 = vld [vmem:[%s2] sm:$0x1]
      %v213 = vlaneseq
      %v214 = vshrl.u32 %v213, 7
      %v215 = vsub.s32 0, %v214
      %v216 = vrot.slane %v211, %v215
      %v250 = vunpack.c.l.b16 %v175
      %v251 = vunpack.c.l.b16 %v176
      %v252 = vunpack.c.l.b16 %v177
      %v253 = vunpack.c.l.b16 %v178
      %v254 = vunpack.c.l.b16 %v179
      %v255 = vunpack.c.l.b16 %v180
      %v256 = vunpack.c.l.b16 %v181
      %v257 = vunpack.c.l.b16 %v182
      %v258 = vunpack.c.l.b16 %v183
      %v259 = vunpack.c.l.b16 %v184
      %v260 = vunpack.c.l.b16 %v185
      %v261 = vunpack.c.l.b16 %v186
      %v262 = vunpack.c.l.b16 %v187
      %v263 = vunpack.c.l.b16 %v188
      %v264 = vunpack.c.l.b16 %v189
      %v265 = vunpack.c.l.b16 %v190
      %v266 = vunpack.c.l.b16 %v191
      %v267 = vunpack.c.l.b16 %v192
      %v268 = vunpack.c.l.b16 %v193
      %v269 = vunpack.c.l.b16 %v194
      %v270 = vunpack.c.l.b16 %v195
      %v271 = vunpack.c.l.b16 %v196
      %v272 = vunpack.c.l.b16 %v197
      %v273 = vunpack.c.l.b16 %v198
      %v274 = vunpack.c.l.b16 %v199
      %v275 = vunpack.c.l.b16 %v200
      %v276 = vunpack.c.l.b16 %v201
      %v277 = vunpack.c.l.b16 %v202
      %v278 = vunpack.c.l.b16 %v203
      %v279 = vunpack.c.l.b16 %v204
      %v280 = vunpack.c.l.b16 %v205
      %v281 = vunpack.c.l.b16 %v206
      %v282 = vpack.c.b16 %v251, %v250
      %v283 = vpack.c.b16 %v253, %v252
      %v284 = vpack.c.b16 %v255, %v254
      %v285 = vpack.c.b16 %v257, %v256
      %v286 = vpack.c.b16 %v259, %v258
      %v287 = vpack.c.b16 %v261, %v260
      %v288 = vpack.c.b16 %v263, %v262
      %v289 = vpack.c.b16 %v265, %v264
      %v290 = vpack.c.b16 %v267, %v266
      %v291 = vpack.c.b16 %v269, %v268
      %v292 = vpack.c.b16 %v271, %v270
      %v293 = vpack.c.b16 %v273, %v272
      %v294 = vpack.c.b16 %v275, %v274
      %v295 = vpack.c.b16 %v277, %v276
      %v296 = vpack.c.b16 %v279, %v278
      %v297 = vpack.c.b16 %v281, %v280
      %v302 = vunpack.c.l.b16 %v207
      %v303 = vunpack.c.l.b16 %v208
      %v304 = vunpack.c.l.b16 %v209
      %v305 = vunpack.c.l.b16 %v210
      %v306 = vpack.c.b16 %v303, %v302
      %v307 = vpack.c.b16 %v305, %v304
      %vm310 = vcmask 261120
      %v312 = vsel %vm310, %v282, 0
      %v315 = vsel %vm310, %v283, 0
      %v318 = vsel %vm310, %v284, 0
      %v321 = vsel %vm310, %v285, 0
      %v324 = vsel %vm310, %v286, 0
      %v327 = vsel %vm310, %v287, 0
      %v330 = vsel %vm310, %v288, 0
      %v333 = vsel %vm310, %v289, 0
      %v336 = vsel %vm310, %v290, 0
      %v339 = vsel %vm310, %v291, 0
      %v342 = vsel %vm310, %v292, 0
      %v345 = vsel %vm310, %v293, 0
      %v348 = vsel %vm310, %v294, 0
      %v351 = vsel %vm310, %v295, 0
      %v354 = vsel %vm310, %v296, 0
      %v357 = vsel %vm310, %v297, 0
      %359 = vmatprep.subr.bf16.mxu0 0
      %360 = vmatpush1.bf16.msra.mxu0 %v306
      %361 = vmatprep.subr.bf16.mxu0 0
      %362 = vmatpush1.bf16.msra.mxu0 %v307
      %363 = vmatprep.subr.bf16.mxu0 0
      %364 = vmatpush1.bf16.msra.mxu0 0
      %365 = vmatprep.subr.bf16.mxu0 0
      %366 = vmatpush1.bf16.msra.mxu0 0
      %367 = vmatprep.subr.bf16.mxu0 0
      %368 = vmatpush1.bf16.msra.mxu0 0
      %369 = vmatprep.subr.bf16.mxu0 0
      %370 = vmatpush1.bf16.msra.mxu0 0
      %371 = vmatprep.subr.bf16.mxu0 0
      %372 = vmatpush1.bf16.msra.mxu0 0
      %373 = vmatprep.subr.bf16.mxu0 0
      %374 = vmatpush1.bf16.msra.mxu0 0
      %375 = vmatprep.subr.bf16.mxu0 0
      %376 = vmatpush1.bf16.msra.mxu0 0
      %377 = vmatprep.subr.bf16.mxu0 0
      %378 = vmatpush1.bf16.msra.mxu0 0
      %379 = vmatprep.subr.bf16.mxu0 0
      %380 = vmatpush1.bf16.msra.mxu0 0
      %381 = vmatprep.subr.bf16.mxu0 0
      %382 = vmatpush1.bf16.msra.mxu0 0
      %383 = vmatprep.subr.bf16.mxu0 0
      %384 = vmatpush1.bf16.msra.mxu0 0
      %385 = vmatprep.subr.bf16.mxu0 0
      %386 = vmatpush1.bf16.msra.mxu0 0
      %387 = vmatprep.subr.bf16.mxu0 0
      %388 = vmatpush1.bf16.msra.mxu0 0
      %389 = vmatprep.subr.bf16.mxu0 0
      %390 = vmatpush1.bf16.msra.mxu0 0
      %391 = vmatprep.mubr.bf16.mxu0 0
      %392 = vmatmul.mubr.bf16.gmra.mrb[0].mxu0 %v312
      %v393 = vpop.f32.mrb[0].mxu0
      %v394 = vadd.f32 %v216, %v393
      %v395 = vpop.f32.mrb[0].mxu0
      %v396 = vpop.f32.mrb[0].mxu0
      %v397 = vadd.f32 %v216, %v396
      %v398 = vpop.f32.mrb[0].mxu0
      %399 = vmatprep.mubr.bf16.mxu0 0
      %400 = vmatmul.mubr.bf16.gmra.mrb[0].mxu0 %v315
      %v401 = vpop.f32.mrb[0].mxu0
      %v402 = vadd.f32 %v216, %v401
      %v403 = vpop.f32.mrb[0].mxu0
      %v404 = vpop.f32.mrb[0].mxu0
      %v405 = vadd.f32 %v216, %v404
      %v406 = vpop.f32.mrb[0].mxu0
      %407 = vmatprep.mubr.bf16.mxu0 0
      %408 = vmatmul.mubr.bf16.gmra.mrb[0].mxu0 %v318
      %v409 = vpop.f32.mrb[0].mxu0
      %v410 = vadd.f32 %v216, %v409
      %v411 = vpop.f32.mrb[0].mxu0
      %v412 = vpop.f32.mrb[0].mxu0
      %v413 = vadd.f32 %v216, %v412
      %v414 = vpop.f32.mrb[0].mxu0
      %415 = vmatprep.mubr.bf16.mxu0 0
      %416 = vmatmul.mubr.bf16.gmra.mrb[0].mxu0 %v321
      %v417 = vpop.f32.mrb[0].mxu0
      %v418 = vadd.f32 %v216, %v417
      %v419 = vpop.f32.mrb[0].mxu0
      %v420 = vpop.f32.mrb[0].mxu0
      %v421 = vadd.f32 %v216, %v420
      %v422 = vpop.f32.mrb[0].mxu0
      %423 = vmatprep.mubr.bf16.mxu0 0
      %424 = vmatmul.mubr.bf16.gmra.mrb[0].mxu0 %v324
      %v425 = vpop.f32.mrb[0].mxu0
      %v426 = vadd.f32 %v216, %v425
      %v427 = vpop.f32.mrb[0].mxu0
      %v428 = vpop.f32.mrb[0].mxu0
      %v429 = vadd.f32 %v216, %v428
      %v430 = vpop.f32.mrb[0].mxu0
      %431 = vmatprep.mubr.bf16.mxu0 0
      %432 = vmatmul.mubr.bf16.gmra.mrb[0].mxu0 %v327
      %v433 = vpop.f32.mrb[0].mxu0
      %v434 = vadd.f32 %v216, %v433
      %v435 = vpop.f32.mrb[0].mxu0
      %v436 = vpop.f32.mrb[0].mxu0
      %v437 = vadd.f32 %v216, %v436
      %v438 = vpop.f32.mrb[0].mxu0
      %439 = vmatprep.mubr.bf16.mxu0 0
      %440 = vmatmul.mubr.bf16.gmra.mrb[0].mxu0 %v330
      %v441 = vpop.f32.mrb[0].mxu0
      %v442 = vadd.f32 %v216, %v441
      %v443 = vpop.f32.mrb[0].mxu0
      %v444 = vpop.f32.mrb[0].mxu0
      %v445 = vadd.f32 %v216, %v444
      %v446 = vpop.f32.mrb[0].mxu0
      %447 = vmatprep.mubr.bf16.mxu0 0
      %448 = vmatmul.mubr.bf16.gmra.mrb[0].mxu0 %v333
      %v449 = vpop.f32.mrb[0].mxu0
      %v450 = vadd.f32 %v216, %v449
      %v451 = vpop.f32.mrb[0].mxu0
      %v452 = vpop.f32.mrb[0].mxu0
      %v453 = vadd.f32 %v216, %v452
      %v454 = vpop.f32.mrb[0].mxu0
      %455 = vmatprep.mubr.bf16.mxu0 0
      %456 = vmatmul.mubr.bf16.gmra.mrb[0].mxu0 %v336
      %v457 = vpop.f32.mrb[0].mxu0
      %v458 = vadd.f32 %v216, %v457
      %v459 = vpop.f32.mrb[0].mxu0
      %v460 = vpop.f32.mrb[0].mxu0
      %v461 = vadd.f32 %v216, %v460
      %v462 = vpop.f32.mrb[0].mxu0
      %463 = vmatprep.mubr.bf16.mxu0 0
      %464 = vmatmul.mubr.bf16.gmra.mrb[0].mxu0 %v339
      %v465 = vpop.f32.mrb[0].mxu0
      %v466 = vadd.f32 %v216, %v465
      %v467 = vpop.f32.mrb[0].mxu0
      %v468 = vpop.f32.mrb[0].mxu0
      %v469 = vadd.f32 %v216, %v468
      %v470 = vpop.f32.mrb[0].mxu0
      %471 = vmatprep.mubr.bf16.mxu0 0
      %472 = vmatmul.mubr.bf16.gmra.mrb[0].mxu0 %v342
      %v473 = vpop.f32.mrb[0].mxu0
      %v474 = vadd.f32 %v216, %v473
      %v475 = vpop.f32.mrb[0].mxu0
      %v476 = vpop.f32.mrb[0].mxu0
      %v477 = vadd.f32 %v216, %v476
      %v478 = vpop.f32.mrb[0].mxu0
      %479 = vmatprep.mubr.bf16.mxu0 0
      %480 = vmatmul.mubr.bf16.gmra.mrb[0].mxu0 %v345
      %v481 = vpop.f32.mrb[0].mxu0
      %v482 = vadd.f32 %v216, %v481
      %v483 = vpop.f32.mrb[0].mxu0
      %v484 = vpop.f32.mrb[0].mxu0
      %v485 = vadd.f32 %v216, %v484
      %v486 = vpop.f32.mrb[0].mxu0
      %487 = vmatprep.mubr.bf16.mxu0 0
      %488 = vmatmul.mubr.bf16.gmra.mrb[0].mxu0 %v348
      %v489 = vpop.f32.mrb[0].mxu0
      %v490 = vadd.f32 %v216, %v489
      %v491 = vpop.f32.mrb[0].mxu0
      %v492 = vpop.f32.mrb[0].mxu0
      %v493 = vadd.f32 %v216, %v492
      %v494 = vpop.f32.mrb[0].mxu0
      %495 = vmatprep.mubr.bf16.mxu0 0
      %496 = vmatmul.mubr.bf16.gmra.mrb[0].mxu0 %v351
      %v497 = vpop.f32.mrb[0].mxu0
      %v498 = vadd.f32 %v216, %v497
      %v499 = vpop.f32.mrb[0].mxu0
      %v500 = vpop.f32.mrb[0].mxu0
      %v501 = vadd.f32 %v216, %v500
      %v502 = vpop.f32.mrb[0].mxu0
      %503 = vmatprep.mubr.bf16.mxu0 0
      %504 = vmatmul.mubr.bf16.gmra.mrb[0].mxu0 %v354
      %v505 = vpop.f32.mrb[0].mxu0
      %v506 = vadd.f32 %v216, %v505
      %v507 = vpop.f32.mrb[0].mxu0
      %v508 = vpop.f32.mrb[0].mxu0
      %v509 = vadd.f32 %v216, %v508
      %v510 = vpop.f32.mrb[0].mxu0
      %511 = vmatprep.mubr.bf16.mxu0 0
      %512 = vmatmul.mubr.bf16.gmra.mrb[0].mxu0 %v357
      %v513 = vpop.f32.mrb[0].mxu0
      %v514 = vadd.f32 %v216, %v513
      %v515 = vpop.f32.mrb[0].mxu0
      %v516 = vpop.f32.mrb[0].mxu0
      %v517 = vadd.f32 %v216, %v516
      %v518 = vpop.f32.mrb[0].mxu0
      %519 = vdwg.mxu0
      %v520 = vmax.f32 %v394, 0.0
      %v521 = vmax.f32 %v397, 0.0
      %v522 = vmax.f32 %v402, 0.0
      %v523 = vmax.f32 %v405, 0.0
      %v524 = vmax.f32 %v410, 0.0
      %v525 = vmax.f32 %v413, 0.0
      %v526 = vmax.f32 %v418, 0.0
      %v527 = vmax.f32 %v421, 0.0
      %v528 = vmax.f32 %v426, 0.0
      %v529 = vmax.f32 %v429, 0.0
      %v530 = vmax.f32 %v434, 0.0
      %v531 = vmax.f32 %v437, 0.0
      %v532 = vmax.f32 %v442, 0.0
      %v533 = vmax.f32 %v445, 0.0
      %v534 = vmax.f32 %v450, 0.0
      %v535 = vmax.f32 %v453, 0.0
      %v536 = vmax.f32 %v458, 0.0
      %v537 = vmax.f32 %v461, 0.0
      %v538 = vmax.f32 %v466, 0.0
      %v539 = vmax.f32 %v469, 0.0
      %v540 = vmax.f32 %v474, 0.0
      %v541 = vmax.f32 %v477, 0.0
      %v542 = vmax.f32 %v482, 0.0
      %v543 = vmax.f32 %v485, 0.0
      %v544 = vmax.f32 %v490, 0.0
      %v545 = vmax.f32 %v493, 0.0
      %v546 = vmax.f32 %v498, 0.0
      %v547 = vmax.f32 %v501, 0.0
      %v548 = vmax.f32 %v506, 0.0
      %v549 = vmax.f32 %v509, 0.0
      %v550 = vmax.f32 %v514, 0.0
      %v551 = vmax.f32 %v517, 0.0
      %v552 = vpack.c.bf16 %v521, %v520
      %v553 = vpack.c.bf16 %v523, %v522
      %v554 = vpack.c.bf16 %v525, %v524
      %v555 = vpack.c.bf16 %v527, %v526
      %v556 = vpack.c.bf16 %v529, %v528
      %v557 = vpack.c.bf16 %v531, %v530
      %v558 = vpack.c.bf16 %v533, %v532
      %v559 = vpack.c.bf16 %v535, %v534
      %v560 = vpack.c.bf16 %v537, %v536
      %v561 = vpack.c.bf16 %v539, %v538
      %v562 = vpack.c.bf16 %v541, %v540
      %v563 = vpack.c.bf16 %v543, %v542
      %v564 = vpack.c.bf16 %v545, %v544
      %v565 = vpack.c.bf16 %v547, %v546
      %v566 = vpack.c.bf16 %v549, %v548
      %v567 = vpack.c.bf16 %v551, %v550
      %v584 = vunpack.c.l.b16 %v552
      %v585 = vunpack.c.h.b16 %v552
      %v586 = vunpack.c.l.b16 %v553
      %v587 = vunpack.c.h.b16 %v553
      %v588 = vunpack.c.l.b16 %v554
      %v589 = vunpack.c.h.b16 %v554
      %v590 = vunpack.c.l.b16 %v555
      %v591 = vunpack.c.h.b16 %v555
      %v592 = vunpack.c.l.b16 %v556
      %v593 = vunpack.c.h.b16 %v556
      %v594 = vunpack.c.l.b16 %v557
      %v595 = vunpack.c.h.b16 %v557
      %v596 = vunpack.c.l.b16 %v558
      %v597 = vunpack.c.h.b16 %v558
      %v598 = vunpack.c.l.b16 %v559
      %v599 = vunpack.c.h.b16 %v559
      %v600 = vunpack.c.l.b16 %v560
      %v601 = vunpack.c.h.b16 %v560
      %v602 = vunpack.c.l.b16 %v561
      %v603 = vunpack.c.h.b16 %v561
      %v604 = vunpack.c.l.b16 %v562
      %v605 = vunpack.c.h.b16 %v562
      %v606 = vunpack.c.l.b16 %v563
      %v607 = vunpack.c.h.b16 %v563
      %v608 = vunpack.c.l.b16 %v564
      %v609 = vunpack.c.h.b16 %v564
      %v610 = vunpack.c.l.b16 %v565
      %v611 = vunpack.c.h.b16 %v565
      %v612 = vunpack.c.l.b16 %v566
      %v613 = vunpack.c.h.b16 %v566
      %v614 = vunpack.c.l.b16 %v567
      %v615 = vunpack.c.h.b16 %v567
      %v616 = vpack.c.b16 %v584, %v584
      %v617 = vpack.c.b16 %v585, %v585
      %v618 = vpack.c.b16 %v586, %v586
      %v619 = vpack.c.b16 %v587, %v587
      %v620 = vpack.c.b16 %v588, %v588
      %v621 = vpack.c.b16 %v589, %v589
      %v622 = vpack.c.b16 %v590, %v590
      %v623 = vpack.c.b16 %v591, %v591
      %v624 = vpack.c.b16 %v592, %v592
      %v625 = vpack.c.b16 %v593, %v593
      %v626 = vpack.c.b16 %v594, %v594
      %v627 = vpack.c.b16 %v595, %v595
      %v628 = vpack.c.b16 %v596, %v596
      %v629 = vpack.c.b16 %v597, %v597
      %v630 = vpack.c.b16 %v598, %v598
      %v631 = vpack.c.b16 %v599, %v599
      %v632 = vpack.c.b16 %v600, %v600
      %v633 = vpack.c.b16 %v601, %v601
      %v634 = vpack.c.b16 %v602, %v602
      %v635 = vpack.c.b16 %v603, %v603
      %v636 = vpack.c.b16 %v604, %v604
      %v637 = vpack.c.b16 %v605, %v605
      %v638 = vpack.c.b16 %v606, %v606
      %v639 = vpack.c.b16 %v607, %v607
      %v640 = vpack.c.b16 %v608, %v608
      %v641 = vpack.c.b16 %v609, %v609
      %v642 = vpack.c.b16 %v610, %v610
      %v643 = vpack.c.b16 %v611, %v611
      %v644 = vpack.c.b16 %v612, %v612
      %v645 = vpack.c.b16 %v613, %v613
      %v646 = vpack.c.b16 %v614, %v614
      %v647 = vpack.c.b16 %v615, %v615
      %680 = vst [vmem:[%s172] sm:$0xf] %v616
      %681 = vst [vmem:[%s172 + $0x4] sm:$0xf] %v617
      %682 = vst [vmem:[%s172 + $0x8] sm:$0xf] %v618
      %683 = vst [vmem:[%s172 + $0xc] sm:$0xf] %v619
      %684 = vst [vmem:[%s172 + $0x10] sm:$0xf] %v620
      %685 = vst [vmem:[%s172 + $0x14] sm:$0xf] %v621
      %686 = vst [vmem:[%s172 + $0x18] sm:$0xf] %v622
      %687 = vst [vmem:[%s172 + $0x1c] sm:$0xf] %v623
      %688 = vst [vmem:[%s172 + $0x20] sm:$0xf] %v624
      %689 = vst [vmem:[%s172 + $0x24] sm:$0xf] %v625
      %690 = vst [vmem:[%s172 + $0x28] sm:$0xf] %v626
      %691 = vst [vmem:[%s172 + $0x2c] sm:$0xf] %v627
      %692 = vst [vmem:[%s172 + $0x30] sm:$0xf] %v628
      %693 = vst [vmem:[%s172 + $0x34] sm:$0xf] %v629
      %694 = vst [vmem:[%s172 + $0x38] sm:$0xf] %v630
      %695 = vst [vmem:[%s172 + $0x3c] sm:$0xf] %v631
      %696 = vst [vmem:[%s172 + $0x40] sm:$0xf] %v632
      %697 = vst [vmem:[%s172 + $0x44] sm:$0xf] %v633
      %698 = vst [vmem:[%s172 + $0x48] sm:$0xf] %v634
      %699 = vst [vmem:[%s172 + $0x4c] sm:$0xf] %v635
      %700 = vst [vmem:[%s172 + $0x50] sm:$0xf] %v636
      %701 = vst [vmem:[%s172 + $0x54] sm:$0xf] %v637
      %702 = vst [vmem:[%s172 + $0x58] sm:$0xf] %v638
      %703 = vst [vmem:[%s172 + $0x5c] sm:$0xf] %v639
      %704 = vst [vmem:[%s172 + $0x60] sm:$0xf] %v640
      %705 = vst [vmem:[%s172 + $0x64] sm:$0xf] %v641
      %706 = vst [vmem:[%s172 + $0x68] sm:$0xf] %v642
      %707 = vst [vmem:[%s172 + $0x6c] sm:$0xf] %v643
      %708 = vst [vmem:[%s172 + $0x70] sm:$0xf] %v644
      %709 = vst [vmem:[%s172 + $0x74] sm:$0xf] %v645
      %710 = vst [vmem:[%s172 + $0x78] sm:$0xf] %v646
      %711 = vst [vmem:[%s172 + $0x7c] sm:$0xf] %v647
      %s712 = smul.u32 32, %s14
      %p713 = scmp.lt.s32.totalorder %s712, 63
      %s714 = scalar_select %p713, %s712, 63
      %s715 = smul.addr %s714, 4
      %s716 = scalar_lea.vmem %s3, %s715
      // Predicated region
      $region33: #{a_call__.1} parent=31 // pred_check
        %p717 = pneg %p100
      $region34: #{a_call__.1} parent=31 // pred_check_branch
        %719 = sbr.rel (%p717) target = $region36
      $region35: #{a_call__.1} parent=31 // pred_region
        %s720 = smul.u32 32, %s14
      $region36: #{a_call__.1} parent=31 // pred_fallthru
        _
    $region32: #{a_call__.1} parent=5 // pred_fallthru
      _
    %p721 = scmp.le.s32.totalorder 2, %s9
    // Predicated region
    $region37: #{a_call__.1} parent=5 // pred_check
      %p722 = pneg %p721
    $region38: #{a_call__.1} parent=5 // pred_check_branch
      %724 = sbr.rel (%p722) target = $region40
    $region39: #{a_call__.1} parent=5 // pred_region
      %s725 = ssub.s32 %s9, 2
      // Predicated region
      $region41: #{a_call__.1} parent=39 // pred_check
        %p726 = pneg %p106
      $region42: #{a_call__.1} parent=39 // pred_check_branch
        %728 = sbr.rel (%p726) target = $region44
      $region43: #{a_call__.1} parent=39 // pred_region
        %s729 = smul.u32 32, %s15
        %p730 = scmp.lt.s32.totalorder %s729, 63
        %s731 = scalar_select %p730, %s729, 63
        %s732 = smul.addr %s731, 4
        %s733 = scalar_lea.vmem %s3, %s732
      $region44: #{a_call__.1} parent=39 // pred_fallthru
        _
    $region40: #{a_call__.1} parent=5 // pred_fallthru
      _
  $region6: #{a_call__.1} parent=0 // loop_footer
    %s13 = sadd.s32 1, %s9
  $region7: #{a_call__.1} parent=0 // loop_footer_branch
    %8 = sbr.rel target = $region3
  $region8: #{a_call__.1} parent=0 // loop_exit
    _

</llo_original>
